<compile_context>
chip_gen: v6e
topology: v6e:2x2x1
jax: 0.10.0
libtpu: 0.0.40
codegen_flags: <defaults>
</compile_context>

<pallas_src>
import jax
import jax.numpy as jnp
from jax import lax
from jax.experimental import pallas as pl
from jax.experimental.pallas import tpu as pltpu

HEAD_LANES = 128  # output slab padded to a lane-dense multiple of 128


def _round_up(v, m):
    return ((v + m - 1) // m) * m


def _make_kernel(chunk_rows, n_chunks):
    """Kernel for one batch tile, processed in `n_chunks` row chunks so the MXU
    matmul of chunk j co-issues with the VPU epilogue of chunk j-1."""

    def kernel(x_ref, w1_ref, b1_ref, we_ref, be_ref, wh_ref, bh_ref, out_ref):
        cd = w1_ref.dtype  # MXU compute dtype (bf16 or f32)

        def one_chunk(r0):
            # Cast x in-kernel (x stays f32 in HBM -> 4B/elem traffic, no wrapper op).
            x = x_ref[pl.ds(r0, chunk_rows), :].astype(cd)
            # backbone: hidden = relu(x @ W1 + b1)   (bias/ReLU in f32)
            h = jnp.dot(x, w1_ref[...], preferred_element_type=jnp.float32) + b1_ref[...]
            h = jnp.maximum(h, 0.0)
            # fused encoder1|encoder2 (+ outer ReLU)
            o = jnp.dot(h.astype(cd), we_ref[...], preferred_element_type=jnp.float32) + be_ref[...]
            o = jnp.maximum(o, 0.0)
            # fused block-diag heads -> [mean_t | log_var_t | mean_s | log_var_s | pad]
            heads = jnp.dot(o.astype(cd), wh_ref[...], preferred_element_type=jnp.float32) + bh_ref[...]
            out_ref[pl.ds(r0, chunk_rows), :] = heads.astype(out_ref.dtype)

        if n_chunks == 1:
            one_chunk(0)
        else:
            def body(c, carry):
                one_chunk(pl.multiple_of(c * chunk_rows, chunk_rows))
                return carry
            lax.fori_loop(0, n_chunks, body, 0, unroll=True)

    return kernel


def init_linear(key, in_f, out_f):
    """PyTorch-style uniform(-1/sqrt(fan_in), 1/sqrt(fan_in)) init (deterministic)."""
    kw, kb = jax.random.split(key)
    bound = 1.0 / jnp.sqrt(jnp.float32(in_f))
    w = jax.random.uniform(kw, (out_f, in_f), jnp.float32, -bound, bound)
    b = jax.random.uniform(kb, (out_f,), jnp.float32, -bound, bound)
    return w, b


def make_params(key, input_dim, z_dim, in_features, hidden_features):
    keys = jax.random.split(key, 7)
    return {
        "fc1": init_linear(keys[0], in_features, hidden_features),
        "e1": init_linear(keys[1], hidden_features, input_dim),
        "e2": init_linear(keys[2], hidden_features, input_dim),
        "m1": init_linear(keys[3], input_dim, z_dim),
        "lv1": init_linear(keys[4], input_dim, z_dim),
        "m2": init_linear(keys[5], input_dim, z_dim),
        "lv2": init_linear(keys[6], input_dim, z_dim),
    }


def _pack_weights(params, compute_dtype):
    """Fuse the 7 PyTorch linears into 3 matmuls worth of pre-transposed weights."""
    w_fc1 = params["fc1"][0].T.astype(compute_dtype)                 # (in_f, hidden)
    b_fc1 = params["fc1"][1].reshape(1, -1).astype(jnp.float32)      # (1, hidden)

    we1, be1 = params["e1"]
    we2, be2 = params["e2"]
    w_enc = jnp.concatenate([we1.T, we2.T], axis=1).astype(compute_dtype)   # (hidden, 2*in_dim)
    b_enc = jnp.concatenate([be1, be2]).reshape(1, -1).astype(jnp.float32)  # (1, 2*in_dim)

    wm1, bm1 = params["m1"]
    wlv1, blv1 = params["lv1"]
    wm2, bm2 = params["m2"]
    wlv2, blv2 = params["lv2"]
    z_dim, input_dim = wm1.shape
    z4 = 4 * z_dim
    heads_dim = _round_up(z4, HEAD_LANES)   # lane-dense output slab (kills masked stores)
    # TODO(synk): for production sizes where 2*input_dim / 4*z_dim exceed one MXU pass,
    # split this block-diagonal matmul back into two dense matmuls on static slab halves.
    top = jnp.concatenate([wm1.T, wlv1.T], axis=1)   # (input_dim, 2*z_dim) heads of o1
    bot = jnp.concatenate([wm2.T, wlv2.T], axis=1)   # (input_dim, 2*z_dim) heads of o2
    w_heads = jnp.zeros((2 * input_dim, heads_dim), jnp.float32)
    w_heads = w_heads.at[:input_dim, 0:2 * z_dim].set(top)
    w_heads = w_heads.at[input_dim:, 2 * z_dim:z4].set(bot)
    w_heads = w_heads.astype(compute_dtype)
    b_heads = jnp.zeros((1, heads_dim), jnp.float32)
    b_heads = b_heads.at[0, :z4].set(jnp.concatenate([bm1, blv1, bm2, blv2]))

    return (w_fc1, b_fc1, w_enc, b_enc, w_heads, b_heads), (input_dim, z_dim, heads_dim)


def _vmem_limit_bytes():
    # v5e/v6e: 128 MiB physical VMEM; v7x: 64 MiB. Leave headroom for Mosaic scratch.
    try:
        cap = pltpu.get_tpu_info().vmem_capacity_bytes
    except Exception:
        cap = 64 * 1024 * 1024  # conservative (v7x-sized) default
    return int(min(96 * 1024 * 1024, (cap * 3) // 4))


def odr_encoder_mlp_forward(x, params, *, compute_dtype=jnp.bfloat16, batch_tile=512):
    B, in_features = x.shape
    (w_fc1, b_fc1, w_enc, b_enc, w_heads, b_heads), (input_dim, z_dim, heads_dim) = _pack_weights(
        params, compute_dtype)
    hidden_f = w_fc1.shape[1]
    enc_dim = 2 * input_dim

    # --- batch tiling: big tiles amortize the ~0.35us/step overhead ---------
    tb = min(batch_tile, _round_up(B, 8))
    if pl.cdiv(B, tb) == 1 and B >= 512:
        # v7x has 2 TensorCores: keep >= 2 "parallel" grid steps so both get work.
        tb = _round_up(pl.cdiv(B, 2), 128)
    grid_b = pl.cdiv(B, tb)  # Pallas masks the partial last tile; no wrapper pad needed.

    # In-tile row chunks for MXU/VPU overlap; only when the tile is large enough.
    if tb >= 512 and tb % 256 == 0:
        chunk_rows = 256
    elif tb >= 256 and tb % 128 == 0:
        chunk_rows = 128
    else:
        chunk_rows = tb
    n_chunks = tb // chunk_rows

    kernel = _make_kernel(chunk_rows, n_chunks)

    # Advisory cost estimate (weights counted once: they are resident).
    rows = grid_b * tb
    flops = 2 * rows * (in_features * hidden_f + hidden_f * enc_dim + enc_dim * heads_dim)
    weight_bytes = sum(a.size * a.dtype.itemsize
                       for a in (w_fc1, b_fc1, w_enc, b_enc, w_heads, b_heads))
    bytes_accessed = x.size * x.dtype.itemsize + weight_bytes + rows * heads_dim * 4

    def build(single_buffer_weights):
        # Resident weights (constant index_map) never change: Buffered(1) frees their
        # second VMEM copy (matters most on v7x's 64 MiB VMEM).
        pm = pl.Buffered(1) if single_buffer_weights else None

        def w_spec(shape):
            return pl.BlockSpec(shape, lambda i: (0, 0), pipeline_mode=pm)

        return pl.pallas_call(
            kernel,
            out_shape=jax.ShapeDtypeStruct((B, heads_dim), jnp.float32),
            grid_spec=pltpu.PrefetchScalarGridSpec(
                num_scalar_prefetch=0,
                grid=(grid_b,),
                in_specs=[
                    pl.BlockSpec((tb, in_features), lambda i: (i, 0)),  # x tile (streamed)
                    w_spec((in_features, hidden_f)),                    # W_fc1
                    w_spec((1, hidden_f)),                              # b_fc1
                    w_spec((hidden_f, enc_dim)),                        # W_enc = [We1|We2]
                    w_spec((1, enc_dim)),                               # b_enc
                    w_spec((enc_dim, heads_dim)),                       # W_heads (block-diag, lane-padded)
                    w_spec((1, heads_dim)),                             # b_heads
                ],
                out_specs=pl.BlockSpec((tb, heads_dim), lambda i: (i, 0)),  # lane-dense slab
            ),
            compiler_params=pltpu.CompilerParams(
                dimension_semantics=("parallel",),       # shard batch tiles over v7x TCs
                vmem_limit_bytes=_vmem_limit_bytes(),
            ),
            cost_estimate=pl.CostEstimate(
                flops=flops, transcendentals=0, bytes_accessed=bytes_accessed),
        )

    args = (x, w_fc1, b_fc1, w_enc, b_enc, w_heads, b_heads)
    try:
        out = build(True)(*args)
    except Exception:
        # TODO(synk): pl.Buffered(1) (single-buffered resident weights) unsupported on
        # this jax version; fall back to default double-buffered weights.
        out = build(False)(*args)

    mean_t = out[:, 0:z_dim]
    log_var_t = out[:, z_dim:2 * z_dim]
    mean_s = out[:, 2 * z_dim:3 * z_dim]
    log_var_s = out[:, 3 * z_dim:4 * z_dim]
    # PyTorch module return order: (mean_t, mean_s, log_var_t, log_var_s)
    return mean_t, mean_s, log_var_t, log_var_s


def reference_forward(x, params):
    """Pure-JAX f32 reference, same return order as the PyTorch module."""
    def lin(a, name):
        w, b = params[name]
        return a @ w.T + b

    h = jax.nn.relu(lin(x, "fc1"))
    o1 = jax.nn.relu(lin(h, "e1"))
    o2 = jax.nn.relu(lin(h, "e2"))
    return (lin(o1, "m1"), lin(o2, "m2"), lin(o1, "lv1"), lin(o2, "lv2"))


if __name__ == "__main__":
    # Small shapes consistent with the module.
    B = 8
    in_features = 32
    hidden_features = 64
    input_dim = 16
    z_dim = 8

    key = jax.random.PRNGKey(0)
    k_x, k_p = jax.random.split(key)
    x = jax.random.normal(k_x, (B, in_features), jnp.float32)
    params = make_params(k_p, input_dim, z_dim, in_features, hidden_features)

    refs = reference_forward(x, params)

    # Default bf16 MXU path — loosened tolerance for bf16 weights/activations.
    outs_bf16 = jax.block_until_ready(
        odr_encoder_mlp_forward(x, params, compute_dtype=jnp.bfloat16))
    for o, r in zip(outs_bf16, refs):
        assert o.shape == (B, z_dim)
        assert jnp.allclose(o, r, atol=5e-2, rtol=5e-2), "bf16 kernel mismatch vs reference"

    # f32 path — tight tolerance sanity check of the fused structure.
    outs_f32 = jax.block_until_ready(
        odr_encoder_mlp_forward(x, params, compute_dtype=jnp.float32))
    for o, r in zip(outs_f32, refs):
        assert o.shape == (B, z_dim)
        assert jnp.allclose(o, r, atol=1e-4, rtol=1e-4), "f32 kernel mismatch vs reference"

    print("KERNEL_OK")
</pallas_src>

<mosaic_0001>
module attributes {stable_mosaic.version = 11 : i64} {
  func.func @kernel(%arg0: i32, %arg1: memref<8x32xf32, #tpu.memory_space<vmem>>, %arg2: memref<32x64xbf16, #tpu.memory_space<vmem>>, %arg3: memref<1x64xf32, #tpu.memory_space<vmem>>, %arg4: memref<64x32xbf16, #tpu.memory_space<vmem>>, %arg5: memref<1x32xf32, #tpu.memory_space<vmem>>, %arg6: memref<32x128xbf16, #tpu.memory_space<vmem>>, %arg7: memref<1x128xf32, #tpu.memory_space<vmem>>, %arg8: memref<8x128xf32, #tpu.memory_space<vmem>>) attributes {dimension_semantics = [#tpu.dimension_semantics<parallel>], iteration_bounds = array<i64: 1>, scalar_prefetch = 0 : i64, scratch_operands = 0 : i64, tpu.core_type = #tpu.core_type<tc>, window_params = [{transform_indices = @transform_0, window_bounds = array<i64: 8, 32>}, {pipeline_mode = #tpu.pipeline_mode<synchronous>, transform_indices = @transform_1, window_bounds = array<i64: 32, 64>}, {pipeline_mode = #tpu.pipeline_mode<synchronous>, transform_indices = @transform_2, window_bounds = array<i64: 1, 64>}, {pipeline_mode = #tpu.pipeline_mode<synchronous>, transform_indices = @transform_3, window_bounds = array<i64: 64, 32>}, {pipeline_mode = #tpu.pipeline_mode<synchronous>, transform_indices = @transform_4, window_bounds = array<i64: 1, 32>}, {pipeline_mode = #tpu.pipeline_mode<synchronous>, transform_indices = @transform_5, window_bounds = array<i64: 32, 128>}, {pipeline_mode = #tpu.pipeline_mode<synchronous>, transform_indices = @transform_6, window_bounds = array<i64: 1, 128>}, {transform_indices = @transform_7, window_bounds = array<i64: 8, 128>}]} {
    %c0 = arith.constant 0 : index
    %c0_0 = arith.constant 0 : index
    %0 = vector.load %arg1[%c0, %c0_0] : memref<8x32xf32, #tpu.memory_space<vmem>>, vector<8x32xf32>
    %1 = arith.truncf %0 : vector<8x32xf32> to vector<8x32xbf16>
    %c0_1 = arith.constant 0 : index
    %c0_2 = arith.constant 0 : index
    %2 = vector.load %arg2[%c0_1, %c0_2] : memref<32x64xbf16, #tpu.memory_space<vmem>>, vector<32x64xbf16>
    %cst = arith.constant dense<0.000000e+00> : vector<8x64xf32>
    %3 = tpu.matmul %1, %2, %cst {dimension_numbers = #tpu.dot_dimension_numbers<[1], [0], [0], [1], [0, 0, 1, 1], [], []>} : vector<8x32xbf16>, vector<32x64xbf16>, vector<8x64xf32> -> vector<8x64xf32>
    %c0_3 = arith.constant 0 : index
    %c0_4 = arith.constant 0 : index
    %4 = vector.load %arg3[%c0_3, %c0_4] : memref<1x64xf32, #tpu.memory_space<vmem>>, vector<1x64xf32>
    %5 = vector.broadcast %4 : vector<1x64xf32> to vector<8x64xf32>
    %6 = arith.addf %3, %5 : vector<8x64xf32>
    %cst_5 = arith.constant 0.000000e+00 : f32
    %7 = vector.broadcast %cst_5 : f32 to vector<8x64xf32>
    %8 = arith.maximumf %6, %7 : vector<8x64xf32>
    %9 = arith.truncf %8 : vector<8x64xf32> to vector<8x64xbf16>
    %c0_6 = arith.constant 0 : index
    %c0_7 = arith.constant 0 : index
    %10 = vector.load %arg4[%c0_6, %c0_7] : memref<64x32xbf16, #tpu.memory_space<vmem>>, vector<64x32xbf16>
    %cst_8 = arith.constant dense<0.000000e+00> : vector<8x32xf32>
    %11 = tpu.matmul %9, %10, %cst_8 {dimension_numbers = #tpu.dot_dimension_numbers<[1], [0], [0], [1], [0, 0, 1, 1], [], []>} : vector<8x64xbf16>, vector<64x32xbf16>, vector<8x32xf32> -> vector<8x32xf32>
    %c0_9 = arith.constant 0 : index
    %c0_10 = arith.constant 0 : index
    %12 = vector.load %arg5[%c0_9, %c0_10] : memref<1x32xf32, #tpu.memory_space<vmem>>, vector<1x32xf32>
    %13 = vector.broadcast %12 : vector<1x32xf32> to vector<8x32xf32>
    %14 = arith.addf %11, %13 : vector<8x32xf32>
    %cst_11 = arith.constant 0.000000e+00 : f32
    %15 = vector.broadcast %cst_11 : f32 to vector<8x32xf32>
    %16 = arith.maximumf %14, %15 : vector<8x32xf32>
    %17 = arith.truncf %16 : vector<8x32xf32> to vector<8x32xbf16>
    %c0_12 = arith.constant 0 : index
    %c0_13 = arith.constant 0 : index
    %18 = vector.load %arg6[%c0_12, %c0_13] : memref<32x128xbf16, #tpu.memory_space<vmem>>, vector<32x128xbf16>
    %cst_14 = arith.constant dense<0.000000e+00> : vector<8x128xf32>
    %19 = tpu.matmul %17, %18, %cst_14 {dimension_numbers = #tpu.dot_dimension_numbers<[1], [0], [0], [1], [0, 0, 1, 1], [], []>} : vector<8x32xbf16>, vector<32x128xbf16>, vector<8x128xf32> -> vector<8x128xf32>
    %c0_15 = arith.constant 0 : index
    %c0_16 = arith.constant 0 : index
    %20 = vector.load %arg7[%c0_15, %c0_16] : memref<1x128xf32, #tpu.memory_space<vmem>>, vector<1x128xf32>
    %21 = vector.broadcast %20 : vector<1x128xf32> to vector<8x128xf32>
    %22 = arith.addf %19, %21 : vector<8x128xf32>
    %c0_17 = arith.constant 0 : index
    %c0_18 = arith.constant 0 : index
    %23 = vector.load %arg8[%c0_17, %c0_18] : memref<8x128xf32, #tpu.memory_space<vmem>>, vector<8x128xf32>
    tpu.vector_store %arg8[%c0_17, %c0_18], %22 {strides = array<i32>} : memref<8x128xf32, #tpu.memory_space<vmem>>, vector<8x128xf32>,
    return
  }
  func.func @transform_0(%arg0: i32) -> (i32, i32) {
    %c0_i32 = arith.constant 0 : i32
    %c0_i32_0 = arith.constant 0 : i32
    return %arg0, %c0_i32 : i32, i32
  }
  func.func @transform_1(%arg0: i32) -> (i32, i32) {
    %c0_i32 = arith.constant 0 : i32
    %c0_i32_0 = arith.constant 0 : i32
    %c0_i32_1 = arith.constant 0 : i32
    return %c0_i32, %c0_i32_0 : i32, i32
  }
  func.func @transform_2(%arg0: i32) -> (i32, i32) {
    %c0_i32 = arith.constant 0 : i32
    %c0_i32_0 = arith.constant 0 : i32
    %c0_i32_1 = arith.constant 0 : i32
    return %c0_i32, %c0_i32_0 : i32, i32
  }
  func.func @transform_3(%arg0: i32) -> (i32, i32) {
    %c0_i32 = arith.constant 0 : i32
    %c0_i32_0 = arith.constant 0 : i32
    %c0_i32_1 = arith.constant 0 : i32
    return %c0_i32, %c0_i32_0 : i32, i32
  }
  func.func @transform_4(%arg0: i32) -> (i32, i32) {
    %c0_i32 = arith.constant 0 : i32
    %c0_i32_0 = arith.constant 0 : i32
    %c0_i32_1 = arith.constant 0 : i32
    return %c0_i32, %c0_i32_0 : i32, i32
  }
  func.func @transform_5(%arg0: i32) -> (i32, i32) {
    %c0_i32 = arith.constant 0 : i32
    %c0_i32_0 = arith.constant 0 : i32
    %c0_i32_1 = arith.constant 0 : i32
    return %c0_i32, %c0_i32_0 : i32, i32
  }
  func.func @transform_6(%arg0: i32) -> (i32, i32) {
    %c0_i32 = arith.constant 0 : i32
    %c0_i32_0 = arith.constant 0 : i32
    %c0_i32_1 = arith.constant 0 : i32
    return %c0_i32, %c0_i32_0 : i32, i32
  }
  func.func @transform_7(%arg0: i32) -> (i32, i32) {
    %c0_i32 = arith.constant 0 : i32
    %c0_i32_0 = arith.constant 0 : i32
    return %arg0, %c0_i32 : i32, i32
  }
}

module attributes {stable_mosaic.version = 11 : i64} {
  func.func @kernel(%arg0: i32, %arg1: memref<8x32xf32, #tpu.memory_space<vmem>>, %arg2: memref<32x64xbf16, #tpu.memory_space<vmem>>, %arg3: memref<1x64xf32, #tpu.memory_space<vmem>>, %arg4: memref<64x32xbf16, #tpu.memory_space<vmem>>, %arg5: memref<1x32xf32, #tpu.memory_space<vmem>>, %arg6: memref<32x128xbf16, #tpu.memory_space<vmem>>, %arg7: memref<1x128xf32, #tpu.memory_space<vmem>>, %arg8: memref<8x128xf32, #tpu.memory_space<vmem>>) attributes {dimension_semantics = [#tpu.dimension_semantics<parallel>], iteration_bounds = array<i64: 1>, scalar_prefetch = 0 : i64, scratch_operands = 0 : i64, tpu.core_type = #tpu.core_type<tc>, window_params = [{transform_indices = @transform_0, window_bounds = array<i64: 8, 32>}, {pipeline_mode = #tpu.pipeline_mode<synchronous>, transform_indices = @transform_1, window_bounds = array<i64: 32, 64>}, {pipeline_mode = #tpu.pipeline_mode<synchronous>, transform_indices = @transform_2, window_bounds = array<i64: 1, 64>}, {pipeline_mode = #tpu.pipeline_mode<synchronous>, transform_indices = @transform_3, window_bounds = array<i64: 64, 32>}, {pipeline_mode = #tpu.pipeline_mode<synchronous>, transform_indices = @transform_4, window_bounds = array<i64: 1, 32>}, {pipeline_mode = #tpu.pipeline_mode<synchronous>, transform_indices = @transform_5, window_bounds = array<i64: 32, 128>}, {pipeline_mode = #tpu.pipeline_mode<synchronous>, transform_indices = @transform_6, window_bounds = array<i64: 1, 128>}, {transform_indices = @transform_7, window_bounds = array<i64: 8, 128>}]} {
    %c0 = arith.constant 0 : index
    %c0_0 = arith.constant 0 : index
    %0 = vector.load %arg1[%c0, %c0_0] : memref<8x32xf32, #tpu.memory_space<vmem>>, vector<8x32xf32>
    %1 = arith.truncf %0 : vector<8x32xf32> to vector<8x32xbf16>
    %c0_1 = arith.constant 0 : index
    %c0_2 = arith.constant 0 : index
    %2 = vector.load %arg2[%c0_1, %c0_2] : memref<32x64xbf16, #tpu.memory_space<vmem>>, vector<32x64xbf16>
    %cst = arith.constant dense<0.000000e+00> : vector<8x64xf32>
    %3 = tpu.matmul %1, %2, %cst {dimension_numbers = #tpu.dot_dimension_numbers<[1], [0], [0], [1], [0, 0, 1, 1], [], []>} : vector<8x32xbf16>, vector<32x64xbf16>, vector<8x64xf32> -> vector<8x64xf32>
    %c0_3 = arith.constant 0 : index
    %c0_4 = arith.constant 0 : index
    %4 = vector.load %arg3[%c0_3, %c0_4] : memref<1x64xf32, #tpu.memory_space<vmem>>, vector<1x64xf32>
    %5 = vector.broadcast %4 : vector<1x64xf32> to vector<8x64xf32>
    %6 = arith.addf %3, %5 : vector<8x64xf32>
    %cst_5 = arith.constant 0.000000e+00 : f32
    %7 = vector.broadcast %cst_5 : f32 to vector<8x64xf32>
    %8 = arith.maximumf %6, %7 : vector<8x64xf32>
    %9 = arith.truncf %8 : vector<8x64xf32> to vector<8x64xbf16>
    %c0_6 = arith.constant 0 : index
    %c0_7 = arith.constant 0 : index
    %10 = vector.load %arg4[%c0_6, %c0_7] : memref<64x32xbf16, #tpu.memory_space<vmem>>, vector<64x32xbf16>
    %cst_8 = arith.constant dense<0.000000e+00> : vector<8x32xf32>
    %11 = tpu.matmul %9, %10, %cst_8 {dimension_numbers = #tpu.dot_dimension_numbers<[1], [0], [0], [1], [0, 0, 1, 1], [], []>} : vector<8x64xbf16>, vector<64x32xbf16>, vector<8x32xf32> -> vector<8x32xf32>
    %c0_9 = arith.constant 0 : index
    %c0_10 = arith.constant 0 : index
    %12 = vector.load %arg5[%c0_9, %c0_10] : memref<1x32xf32, #tpu.memory_space<vmem>>, vector<1x32xf32>
    %13 = vector.broadcast %12 : vector<1x32xf32> to vector<8x32xf32>
    %14 = arith.addf %11, %13 : vector<8x32xf32>
    %cst_11 = arith.constant 0.000000e+00 : f32
    %15 = vector.broadcast %cst_11 : f32 to vector<8x32xf32>
    %16 = arith.maximumf %14, %15 : vector<8x32xf32>
    %17 = arith.truncf %16 : vector<8x32xf32> to vector<8x32xbf16>
    %c0_12 = arith.constant 0 : index
    %c0_13 = arith.constant 0 : index
    %18 = vector.load %arg6[%c0_12, %c0_13] : memref<32x128xbf16, #tpu.memory_space<vmem>>, vector<32x128xbf16>
    %cst_14 = arith.constant dense<0.000000e+00> : vector<8x128xf32>
    %19 = tpu.matmul %17, %18, %cst_14 {dimension_numbers = #tpu.dot_dimension_numbers<[1], [0], [0], [1], [0, 0, 1, 1], [], []>} : vector<8x32xbf16>, vector<32x128xbf16>, vector<8x128xf32> -> vector<8x128xf32>
    %c0_15 = arith.constant 0 : index
    %c0_16 = arith.constant 0 : index
    %20 = vector.load %arg7[%c0_15, %c0_16] : memref<1x128xf32, #tpu.memory_space<vmem>>, vector<1x128xf32>
    %21 = vector.broadcast %20 : vector<1x128xf32> to vector<8x128xf32>
    %22 = arith.addf %19, %21 : vector<8x128xf32>
    %c0_17 = arith.constant 0 : index
    %c0_18 = arith.constant 0 : index
    %23 = vector.load %arg8[%c0_17, %c0_18] : memref<8x128xf32, #tpu.memory_space<vmem>>, vector<8x128xf32>
    tpu.vector_store %arg8[%c0_17, %c0_18], %22 {strides = array<i32>} : memref<8x128xf32, #tpu.memory_space<vmem>>, vector<8x128xf32>,
    return
  }
  func.func @transform_0(%arg0: i32) -> (i32, i32) {
    %c0_i32 = arith.constant 0 : i32
    %c0_i32_0 = arith.constant 0 : i32
    return %arg0, %c0_i32 : i32, i32
  }
  func.func @transform_1(%arg0: i32) -> (i32, i32) {
    %c0_i32 = arith.constant 0 : i32
    %c0_i32_0 = arith.constant 0 : i32
    %c0_i32_1 = arith.constant 0 : i32
    return %c0_i32, %c0_i32_0 : i32, i32
  }
  func.func @transform_2(%arg0: i32) -> (i32, i32) {
    %c0_i32 = arith.constant 0 : i32
    %c0_i32_0 = arith.constant 0 : i32
    %c0_i32_1 = arith.constant 0 : i32
    return %c0_i32, %c0_i32_0 : i32, i32
  }
  func.func @transform_3(%arg0: i32) -> (i32, i32) {
    %c0_i32 = arith.constant 0 : i32
    %c0_i32_0 = arith.constant 0 : i32
    %c0_i32_1 = arith.constant 0 : i32
    return %c0_i32, %c0_i32_0 : i32, i32
  }
  func.func @transform_4(%arg0: i32) -> (i32, i32) {
    %c0_i32 = arith.constant 0 : i32
    %c0_i32_0 = arith.constant 0 : i32
    %c0_i32_1 = arith.constant 0 : i32
    return %c0_i32, %c0_i32_0 : i32, i32
  }
  func.func @transform_5(%arg0: i32) -> (i32, i32) {
    %c0_i32 = arith.constant 0 : i32
    %c0_i32_0 = arith.constant 0 : i32
    %c0_i32_1 = arith.constant 0 : i32
    return %c0_i32, %c0_i32_0 : i32, i32
  }
  func.func @transform_6(%arg0: i32) -> (i32, i32) {
    %c0_i32 = arith.constant 0 : i32
    %c0_i32_0 = arith.constant 0 : i32
    %c0_i32_1 = arith.constant 0 : i32
    return %c0_i32, %c0_i32_0 : i32, i32
  }
  func.func @transform_7(%arg0: i32) -> (i32, i32) {
    %c0_i32 = arith.constant 0 : i32
    %c0_i32_0 = arith.constant 0 : i32
    return %arg0, %c0_i32 : i32, i32
  }
}

</mosaic_0001>

<llo_original>
// kernel: tpu_custom_call.1
$region0: #{tpu_custom_call.1}
  #allocation0 [shape = 'u32[]', space=smem, size = 0x4, offset = 0x4, fixed_abs, tag = 'smem constant byte address 0x4 - core index']
  #allocation1 [shape = 'u32[144,128]{1,0:T(1,128)}', space=vmem, size = 0x12000, scoped, tag = 'internal scratch']
  %s0 = inlined_call_operand.vmem [shape: f32[8,32], index: 0, kind: input, shape index: {}]
  %s1 = inlined_call_operand.vmem [shape: bf16[32,64], index: 1, kind: input, shape index: {}]
  %s2 = inlined_call_operand.vmem [shape: f32[1,64], index: 2, kind: input, shape index: {}]
  %s3 = inlined_call_operand.vmem [shape: bf16[64,32], index: 3, kind: input, shape index: {}]
  %s4 = inlined_call_operand.vmem [shape: f32[1,32], index: 4, kind: input, shape index: {}]
  %s5 = inlined_call_operand.vmem [shape: bf16[32,128], index: 5, kind: input, shape index: {}]
  %s6 = inlined_call_operand.vmem [shape: f32[1,128], index: 6, kind: input, shape index: {}]
  %s7 = inlined_call_operand.hbm [shape: f32[8,128], index: 7, kind: output, shape index: {}]
  %s8 = sld [smem:[#allocation0]]
  $region38: #{tpu_custom_call.1} parent=0
    _
  %s10 = ssub.s32 1, %s8
  %s11 = scalar_select 0, %s10, %s8
  $region1: #{tpu_custom_call.1} parent=0
    #allocation2 [shape = 'u8[4096]{0}', space=vmem, size = 0x1000, scoped, tag = 'output window, operand 0, single buffered']
    #allocation3 [shape = 's32[1]{0}', space=sflag, size = 0x4, scoped, tag = 'scoped memory for tpu_custom_call.1']
    %12 = vsyncpa [#allocation3], 0
    // Predicated region
    $region2: #{tpu_custom_call.1} parent=1 // pred_check
      _
    $region3: #{tpu_custom_call.1} parent=1 // pred_check_branch
      %14 = sbr.rel (0) target = $region5
    $region4: #{tpu_custom_call.1} parent=1 // pred_region
      _
    $region5: #{tpu_custom_call.1} parent=1 // pred_fallthru
      _
    // Predicated region
    $region6: #{tpu_custom_call.1} parent=1 // pred_check
      _
    $region7: #{tpu_custom_call.1} parent=1 // pred_check_branch
      %16 = sbr.rel (0) target = $region9
    $region8: #{tpu_custom_call.1} parent=1 // pred_region
      _
    $region9: #{tpu_custom_call.1} parent=1 // pred_fallthru
      _
    // Predicated region
    $region10: #{tpu_custom_call.1} parent=1 // pred_check
      _
    $region11: #{tpu_custom_call.1} parent=1 // pred_check_branch
      %18 = sbr.rel (0) target = $region13
    $region12: #{tpu_custom_call.1} parent=1 // pred_region
      _
    $region13: #{tpu_custom_call.1} parent=1 // pred_fallthru
      _
    // Predicated region
    $region14: #{tpu_custom_call.1} parent=1 // pred_check
      _
    $region15: #{tpu_custom_call.1} parent=1 // pred_check_branch
      %20 = sbr.rel (0) target = $region17
    $region16: #{tpu_custom_call.1} parent=1 // pred_region
      _
    $region17: #{tpu_custom_call.1} parent=1 // pred_fallthru
      _
    // Predicated region
    $region18: #{tpu_custom_call.1} parent=1 // pred_check
      _
    $region19: #{tpu_custom_call.1} parent=1 // pred_check_branch
      %22 = sbr.rel (0) target = $region21
    $region20: #{tpu_custom_call.1} parent=1 // pred_region
      _
    $region21: #{tpu_custom_call.1} parent=1 // pred_fallthru
      _
    // Predicated region
    $region22: #{tpu_custom_call.1} parent=1 // pred_check
      _
    $region23: #{tpu_custom_call.1} parent=1 // pred_check_branch
      %24 = sbr.rel (0) target = $region25
    $region24: #{tpu_custom_call.1} parent=1 // pred_region
      _
    $region25: #{tpu_custom_call.1} parent=1 // pred_fallthru
      _
    // Predicated region
    $region26: #{tpu_custom_call.1} parent=1 // pred_check
      _
    $region27: #{tpu_custom_call.1} parent=1 // pred_check_branch
      %26 = sbr.rel (0) target = $region29
    $region28: #{tpu_custom_call.1} parent=1 // pred_region
      _
    $region29: #{tpu_custom_call.1} parent=1 // pred_fallthru
      _
    %v28 = vld [vmem:[%s0] sm:$0xff]
    %v29 = vpack.c.bf16 %v28, %v28
    %v30 = vld [vmem:[%s1] sm:$0xf]
    %v31 = vld [vmem:[%s1 + $0x4] sm:$0xf]
    %v32 = vld [vmem:[%s1 + $0x8] sm:$0xf]
    %v33 = vld [vmem:[%s1 + $0xc] sm:$0xf]
    %v34 = vld [vmem:[%s2] sm:$0x1]
    %v36 = vlaneseq
    %v37 = vshrl.u32 %v36, 7
    %v38 = vsub.s32 0, %v37
    %v39 = vrot.slane %v34, %v38
    %v45 = vunpack.c.l.b16 %v30
    %v46 = vunpack.c.l.b16 %v31
    %v47 = vunpack.c.l.b16 %v32
    %v48 = vunpack.c.l.b16 %v33
    %v49 = vpack.c.b16 %v46, %v45
    %v50 = vpack.c.b16 %v48, %v47
    %vm53 = vcmask 261120
    %v55 = vsel %vm53, %v29, 0
    %57 = vmatprep.subr.bf16.mxu0 0
    %58 = vmatpush1.bf16.msra.mxu0 0
    %59 = vmatprep.subr.bf16.mxu0 0
    %60 = vmatpush1.bf16.msra.mxu0 0
    %61 = vmatprep.subr.bf16.mxu0 0
    %62 = vmatpush1.bf16.msra.mxu0 0
    %63 = vmatprep.subr.bf16.mxu0 0
    %64 = vmatpush1.bf16.msra.mxu0 0
    %65 = vmatprep.subr.bf16.mxu0 0
    %66 = vmatpush1.bf16.msra.mxu0 0
    %67 = vmatprep.subr.bf16.mxu0 0
    %68 = vmatpush1.bf16.msra.mxu0 0
    %69 = vmatprep.subr.bf16.mxu0 0
    %70 = vmatpush1.bf16.msra.mxu0 %v50
    %71 = vmatprep.subr.bf16.mxu0 0
    %72 = vmatpush1.bf16.msra.mxu0 %v49
    %73 = vmatprep.subr.bf16.mxu0 0
    %74 = vmatpush2.bf16.msra.mxu0 0
    %75 = vmatprep.subr.bf16.mxu0 0
    %76 = vmatpush2.bf16.msra.mxu0 0
    %77 = vmatprep.subr.bf16.mxu0 0
    %78 = vmatpush2.bf16.msra.mxu0 0
    %79 = vmatprep.subr.bf16.mxu0 0
    %80 = vmatpush2.bf16.msra.mxu0 0
    %81 = vmatprep.subr.bf16.mxu0 0
    %82 = vmatpush2.bf16.msra.mxu0 0
    %83 = vmatprep.subr.bf16.mxu0 0
    %84 = vmatpush2.bf16.msra.mxu0 0
    %85 = vmatprep.subr.bf16.mxu0 0
    %86 = vmatpush2.bf16.msra.mxu0 0
    %87 = vmatprep.subr.bf16.mxu0 0
    %88 = vmatpush2.bf16.msra.mxu0 0
    %89 = vmatprep.mubr.bf16.mxu0 0
    %90 = vmatmul.mubr.bf16.gmra.mxu0 %v55
    %v91 = vpop.f32.mrf.mxu0
    %v92 = vadd.f32 %v39, %v91
    %v93 = vpop.f32.mrf.mxu0
    %v94 = vpop.f32.mrf.mxu0
    %v95 = vpop.f32.mrf.mxu0
    %96 = vdwg.mxu0
    %v97 = vmax.f32 %v92, 0.0
    %v98 = vpack.c.bf16 %v97, %v97
    %v99 = vld [vmem:[%s3] sm:$0xf]
    %v100 = vld [vmem:[%s3 + $0x4] sm:$0xf]
    %v101 = vld [vmem:[%s3 + $0x8] sm:$0xf]
    %v102 = vld [vmem:[%s3 + $0xc] sm:$0xf]
    %v103 = vld [vmem:[%s3 + $0x10] sm:$0xf]
    %v104 = vld [vmem:[%s3 + $0x14] sm:$0xf]
    %v105 = vld [vmem:[%s3 + $0x18] sm:$0xf]
    %v106 = vld [vmem:[%s3 + $0x1c] sm:$0xf]
    %v107 = vld [vmem:[%s4] sm:$0x1]
    %v109 = vlaneseq
    %v110 = vshrl.u32 %v109, 7
    %v111 = vsub.s32 0, %v110
    %v112 = vrot.slane %v107, %v111
    %v122 = vunpack.c.l.b16 %v99
    %v123 = vunpack.c.l.b16 %v100
    %v124 = vunpack.c.l.b16 %v101
    %v125 = vunpack.c.l.b16 %v102
    %v126 = vunpack.c.l.b16 %v103
    %v127 = vunpack.c.l.b16 %v104
    %v128 = vunpack.c.l.b16 %v105
    %v129 = vunpack.c.l.b16 %v106
    %v130 = vpack.c.b16 %v123, %v122
    %v131 = vpack.c.b16 %v125, %v124
    %v132 = vpack.c.b16 %v127, %v126
    %v133 = vpack.c.b16 %v129, %v128
    %vm138 = vcmask 523264
    %v140 = vsel %vm138, %v98, 0
    %142 = vmatprep.subr.bf16.mxu0 0
    %143 = vmatpush1.bf16.msra.mxu0 0
    %144 = vmatprep.subr.bf16.mxu0 0
    %145 = vmatpush1.bf16.msra.mxu0 0
    %146 = vmatprep.subr.bf16.mxu0 0
    %147 = vmatpush1.bf16.msra.mxu0 0
    %148 = vmatprep.subr.bf16.mxu0 0
    %149 = vmatpush1.bf16.msra.mxu0 0
    %150 = vmatprep.subr.bf16.mxu0 0
    %151 = vmatpush1.bf16.msra.mxu0 %v133
    %152 = vmatprep.subr.bf16.mxu0 0
    %153 = vmatpush1.bf16.msra.mxu0 %v132
    %154 = vmatprep.subr.bf16.mxu0 0
    %155 = vmatpush1.bf16.msra.mxu0 %v131
    %156 = vmatprep.subr.bf16.mxu0 0
    %157 = vmatpush1.bf16.msra.mxu0 %v130
    %158 = vmatprep.subr.bf16.mxu0 0
    %159 = vmatpush2.bf16.msra.mxu0 0
    %160 = vmatprep.subr.bf16.mxu0 0
    %161 = vmatpush2.bf16.msra.mxu0 0
    %162 = vmatprep.subr.bf16.mxu0 0
    %163 = vmatpush2.bf16.msra.mxu0 0
    %164 = vmatprep.subr.bf16.mxu0 0
    %165 = vmatpush2.bf16.msra.mxu0 0
    %166 = vmatprep.subr.bf16.mxu0 0
    %167 = vmatpush2.bf16.msra.mxu0 0
    %168 = vmatprep.subr.bf16.mxu0 0
    %169 = vmatpush2.bf16.msra.mxu0 0
    %170 = vmatprep.subr.bf16.mxu0 0
    %171 = vmatpush2.bf16.msra.mxu0 0
    %172 = vmatprep.subr.bf16.mxu0 0
    %173 = vmatpush2.bf16.msra.mxu0 0
    %174 = vmatprep.mubr.bf16.mxu0 0
    %175 = vmatmul.mubr.bf16.gmra.mxu0 %v140
    %v176 = vpop.f32.mrf.mxu0
    %v177 = vadd.f32 %v112, %v176
    %v178 = vpop.f32.mrf.mxu0
    %v179 = vpop.f32.mrf.mxu0
    %v180 = vpop.f32.mrf.mxu0
    %181 = vdwg.mxu0
    %v182 = vmax.f32 %v177, 0.0
    %v183 = vpack.c.bf16 %v182, %v182
    %v184 = vld [vmem:[%s5] sm:$0xf]
    %v185 = vld [vmem:[%s5 + $0x4] sm:$0xf]
    %v186 = vld [vmem:[%s5 + $0x8] sm:$0xf]
    %v187 = vld [vmem:[%s5 + $0xc] sm:$0xf]
    %v188 = vld [vmem:[%s6] sm:$0x1]
    %v190 = vlaneseq
    %v191 = vshrl.u32 %v190, 7
    %v192 = vsub.s32 0, %v191
    %v193 = vrot.slane %v188, %v192
    %v199 = vunpack.c.l.b16 %v184
    %v200 = vunpack.c.l.b16 %v185
    %v201 = vunpack.c.l.b16 %v186
    %v202 = vunpack.c.l.b16 %v187
    %v203 = vpack.c.b16 %v200, %v199
    %v204 = vpack.c.b16 %v202, %v201
    %v208 = vsel %vm53, %v183, 0
    %210 = vmatprep.subr.bf16.mxu0 0
    %211 = vmatpush1.bf16.msra.mxu0 0
    %212 = vmatprep.subr.bf16.mxu0 0
    %213 = vmatpush1.bf16.msra.mxu0 0
    %214 = vmatprep.subr.bf16.mxu0 0
    %215 = vmatpush1.bf16.msra.mxu0 0
    %216 = vmatprep.subr.bf16.mxu0 0
    %217 = vmatpush1.bf16.msra.mxu0 0
    %218 = vmatprep.subr.bf16.mxu0 0
    %219 = vmatpush1.bf16.msra.mxu0 0
    %220 = vmatprep.subr.bf16.mxu0 0
    %221 = vmatpush1.bf16.msra.mxu0 0
    %222 = vmatprep.subr.bf16.mxu0 0
    %223 = vmatpush1.bf16.msra.mxu0 %v204
    %224 = vmatprep.subr.bf16.mxu0 0
    %225 = vmatpush1.bf16.msra.mxu0 %v203
    %226 = vmatprep.subr.bf16.mxu0 0
    %227 = vmatpush2.bf16.msra.mxu0 0
    %228 = vmatprep.subr.bf16.mxu0 0
    %229 = vmatpush2.bf16.msra.mxu0 0
    %230 = vmatprep.subr.bf16.mxu0 0
    %231 = vmatpush2.bf16.msra.mxu0 0
    %232 = vmatprep.subr.bf16.mxu0 0
    %233 = vmatpush2.bf16.msra.mxu0 0
    %234 = vmatprep.subr.bf16.mxu0 0
    %235 = vmatpush2.bf16.msra.mxu0 0
    %236 = vmatprep.subr.bf16.mxu0 0
    %237 = vmatpush2.bf16.msra.mxu0 0
    %238 = vmatprep.subr.bf16.mxu0 0
    %239 = vmatpush2.bf16.msra.mxu0 0
    %240 = vmatprep.subr.bf16.mxu0 0
    %241 = vmatpush2.bf16.msra.mxu0 0
    %242 = vmatprep.mubr.bf16.mxu0 0
    %243 = vmatmul.mubr.bf16.gmra.mxu0 %v208
    %v244 = vpop.f32.mrf.mxu0
    %v245 = vadd.f32 %v193, %v244
    %v246 = vpop.f32.mrf.mxu0
    %v247 = vpop.f32.mrf.mxu0
    %v248 = vpop.f32.mrf.mxu0
    %249 = vdwg.mxu0
    %250 = vst [vmem:[#allocation2] sm:$0xff] %v245
    // Predicated region
    $region30: #{tpu_custom_call.1} parent=1 // pred_check
      _
    $region31: #{tpu_custom_call.1} parent=1 // pred_check_branch
      %252 = sbr.rel (0) target = $region33
    $region32: #{tpu_custom_call.1} parent=1 // pred_region
      %s254 = ssub.s32 128, 128
      %255 = vsyncadd [#allocation3], %s254
      %s257 = sshll.u32 [#allocation2], 4
      %s258 = int_to_ptr.vmem [resolvable:$true] %s257
      %260 = dma.vmem_to_hbm [thread:$0]  %s258, 128, %s7, [#allocation3]
    $region33: #{tpu_custom_call.1} parent=1 // pred_fallthru
      _
    // Predicated region
    $region34: #{tpu_custom_call.1} parent=1 // pred_check
      _
    $region35: #{tpu_custom_call.1} parent=1 // pred_check_branch
      %262 = sbr.rel (0) target = $region37
    $region36: #{tpu_custom_call.1} parent=1 // pred_region
      %263 = dma.done [#allocation3], 128
    $region37: #{tpu_custom_call.1} parent=1 // pred_fallthru
      _
    %264 = vsyncpa [#allocation3], 1

// kernel: tpu_custom_call.1
$region0: #{tpu_custom_call.1}
  #allocation0 [shape = 'u32[]', space=smem, size = 0x4, offset = 0x4, fixed_abs, tag = 'smem constant byte address 0x4 - core index']
  #allocation1 [shape = 'u32[144,128]{1,0:T(1,128)}', space=vmem, size = 0x12000, scoped, tag = 'internal scratch']
  %s0 = inlined_call_operand.vmem [shape: f32[8,32], index: 0, kind: input, shape index: {}]
  %s1 = inlined_call_operand.vmem [shape: bf16[32,64], index: 1, kind: input, shape index: {}]
  %s2 = inlined_call_operand.vmem [shape: f32[1,64], index: 2, kind: input, shape index: {}]
  %s3 = inlined_call_operand.vmem [shape: bf16[64,32], index: 3, kind: input, shape index: {}]
  %s4 = inlined_call_operand.vmem [shape: f32[1,32], index: 4, kind: input, shape index: {}]
  %s5 = inlined_call_operand.vmem [shape: bf16[32,128], index: 5, kind: input, shape index: {}]
  %s6 = inlined_call_operand.vmem [shape: f32[1,128], index: 6, kind: input, shape index: {}]
  %s7 = inlined_call_operand.hbm [shape: f32[8,128], index: 7, kind: output, shape index: {}]
  %s8 = sld [smem:[#allocation0]]
  $region38: #{tpu_custom_call.1} parent=0
    _
  %s10 = ssub.s32 1, %s8
  %s11 = scalar_select 0, %s10, %s8
  $region1: #{tpu_custom_call.1} parent=0
    #allocation2 [shape = 'u8[4096]{0}', space=vmem, size = 0x1000, scoped, tag = 'output window, operand 0, single buffered']
    #allocation3 [shape = 's32[1]{0}', space=sflag, size = 0x4, scoped, tag = 'scoped memory for tpu_custom_call.1']
    %12 = vsyncpa [#allocation3], 0
    // Predicated region
    $region2: #{tpu_custom_call.1} parent=1 // pred_check
      _
    $region3: #{tpu_custom_call.1} parent=1 // pred_check_branch
      %14 = sbr.rel (0) target = $region5
    $region4: #{tpu_custom_call.1} parent=1 // pred_region
      _
    $region5: #{tpu_custom_call.1} parent=1 // pred_fallthru
      _
    // Predicated region
    $region6: #{tpu_custom_call.1} parent=1 // pred_check
      _
    $region7: #{tpu_custom_call.1} parent=1 // pred_check_branch
      %16 = sbr.rel (0) target = $region9
    $region8: #{tpu_custom_call.1} parent=1 // pred_region
      _
    $region9: #{tpu_custom_call.1} parent=1 // pred_fallthru
      _
    // Predicated region
    $region10: #{tpu_custom_call.1} parent=1 // pred_check
      _
    $region11: #{tpu_custom_call.1} parent=1 // pred_check_branch
      %18 = sbr.rel (0) target = $region13
    $region12: #{tpu_custom_call.1} parent=1 // pred_region
      _
    $region13: #{tpu_custom_call.1} parent=1 // pred_fallthru
      _
    // Predicated region
    $region14: #{tpu_custom_call.1} parent=1 // pred_check
      _
    $region15: #{tpu_custom_call.1} parent=1 // pred_check_branch
      %20 = sbr.rel (0) target = $region17
    $region16: #{tpu_custom_call.1} parent=1 // pred_region
      _
    $region17: #{tpu_custom_call.1} parent=1 // pred_fallthru
      _
    // Predicated region
    $region18: #{tpu_custom_call.1} parent=1 // pred_check
      _
    $region19: #{tpu_custom_call.1} parent=1 // pred_check_branch
      %22 = sbr.rel (0) target = $region21
    $region20: #{tpu_custom_call.1} parent=1 // pred_region
      _
    $region21: #{tpu_custom_call.1} parent=1 // pred_fallthru
      _
    // Predicated region
    $region22: #{tpu_custom_call.1} parent=1 // pred_check
      _
    $region23: #{tpu_custom_call.1} parent=1 // pred_check_branch
      %24 = sbr.rel (0) target = $region25
    $region24: #{tpu_custom_call.1} parent=1 // pred_region
      _
    $region25: #{tpu_custom_call.1} parent=1 // pred_fallthru
      _
    // Predicated region
    $region26: #{tpu_custom_call.1} parent=1 // pred_check
      _
    $region27: #{tpu_custom_call.1} parent=1 // pred_check_branch
      %26 = sbr.rel (0) target = $region29
    $region28: #{tpu_custom_call.1} parent=1 // pred_region
      _
    $region29: #{tpu_custom_call.1} parent=1 // pred_fallthru
      _
    %v28 = vld [vmem:[%s0] sm:$0xff]
    %v29 = vpack.c.bf16 %v28, %v28
    %v30 = vld [vmem:[%s1] sm:$0xf]
    %v31 = vld [vmem:[%s1 + $0x4] sm:$0xf]
    %v32 = vld [vmem:[%s1 + $0x8] sm:$0xf]
    %v33 = vld [vmem:[%s1 + $0xc] sm:$0xf]
    %v34 = vld [vmem:[%s2] sm:$0x1]
    %v36 = vlaneseq
    %v37 = vshrl.u32 %v36, 7
    %v38 = vsub.s32 0, %v37
    %v39 = vrot.slane %v34, %v38
    %v45 = vunpack.c.l.b16 %v30
    %v46 = vunpack.c.l.b16 %v31
    %v47 = vunpack.c.l.b16 %v32
    %v48 = vunpack.c.l.b16 %v33
    %v49 = vpack.c.b16 %v46, %v45
    %v50 = vpack.c.b16 %v48, %v47
    %vm53 = vcmask 261120
    %v55 = vsel %vm53, %v29, 0
    %57 = vmatprep.subr.bf16.mxu0 0
    %58 = vmatpush1.bf16.msra.mxu0 0
    %59 = vmatprep.subr.bf16.mxu0 0
    %60 = vmatpush1.bf16.msra.mxu0 0
    %61 = vmatprep.subr.bf16.mxu0 0
    %62 = vmatpush1.bf16.msra.mxu0 0
    %63 = vmatprep.subr.bf16.mxu0 0
    %64 = vmatpush1.bf16.msra.mxu0 0
    %65 = vmatprep.subr.bf16.mxu0 0
    %66 = vmatpush1.bf16.msra.mxu0 0
    %67 = vmatprep.subr.bf16.mxu0 0
    %68 = vmatpush1.bf16.msra.mxu0 0
    %69 = vmatprep.subr.bf16.mxu0 0
    %70 = vmatpush1.bf16.msra.mxu0 %v50
    %71 = vmatprep.subr.bf16.mxu0 0
    %72 = vmatpush1.bf16.msra.mxu0 %v49
    %73 = vmatprep.subr.bf16.mxu0 0
    %74 = vmatpush2.bf16.msra.mxu0 0
    %75 = vmatprep.subr.bf16.mxu0 0
    %76 = vmatpush2.bf16.msra.mxu0 0
    %77 = vmatprep.subr.bf16.mxu0 0
    %78 = vmatpush2.bf16.msra.mxu0 0
    %79 = vmatprep.subr.bf16.mxu0 0
    %80 = vmatpush2.bf16.msra.mxu0 0
    %81 = vmatprep.subr.bf16.mxu0 0
    %82 = vmatpush2.bf16.msra.mxu0 0
    %83 = vmatprep.subr.bf16.mxu0 0
    %84 = vmatpush2.bf16.msra.mxu0 0
    %85 = vmatprep.subr.bf16.mxu0 0
    %86 = vmatpush2.bf16.msra.mxu0 0
    %87 = vmatprep.subr.bf16.mxu0 0
    %88 = vmatpush2.bf16.msra.mxu0 0
    %89 = vmatprep.mubr.bf16.mxu0 0
    %90 = vmatmul.mubr.bf16.gmra.mxu0 %v55
    %v91 = vpop.f32.mrf.mxu0
    %v92 = vadd.f32 %v39, %v91
    %v93 = vpop.f32.mrf.mxu0
    %v94 = vpop.f32.mrf.mxu0
    %v95 = vpop.f32.mrf.mxu0
    %96 = vdwg.mxu0
    %v97 = vmax.f32 %v92, 0.0
    %v98 = vpack.c.bf16 %v97, %v97
    %v99 = vld [vmem:[%s3] sm:$0xf]
    %v100 = vld [vmem:[%s3 + $0x4] sm:$0xf]
    %v101 = vld [vmem:[%s3 + $0x8] sm:$0xf]
    %v102 = vld [vmem:[%s3 + $0xc] sm:$0xf]
    %v103 = vld [vmem:[%s3 + $0x10] sm:$0xf]
    %v104 = vld [vmem:[%s3 + $0x14] sm:$0xf]
    %v105 = vld [vmem:[%s3 + $0x18] sm:$0xf]
    %v106 = vld [vmem:[%s3 + $0x1c] sm:$0xf]
    %v107 = vld [vmem:[%s4] sm:$0x1]
    %v109 = vlaneseq
    %v110 = vshrl.u32 %v109, 7
    %v111 = vsub.s32 0, %v110
    %v112 = vrot.slane %v107, %v111
    %v122 = vunpack.c.l.b16 %v99
    %v123 = vunpack.c.l.b16 %v100
    %v124 = vunpack.c.l.b16 %v101
    %v125 = vunpack.c.l.b16 %v102
    %v126 = vunpack.c.l.b16 %v103
    %v127 = vunpack.c.l.b16 %v104
    %v128 = vunpack.c.l.b16 %v105
    %v129 = vunpack.c.l.b16 %v106
    %v130 = vpack.c.b16 %v123, %v122
    %v131 = vpack.c.b16 %v125, %v124
    %v132 = vpack.c.b16 %v127, %v126
    %v133 = vpack.c.b16 %v129, %v128
    %vm138 = vcmask 523264
    %v140 = vsel %vm138, %v98, 0
    %142 = vmatprep.subr.bf16.mxu0 0
    %143 = vmatpush1.bf16.msra.mxu0 0
    %144 = vmatprep.subr.bf16.mxu0 0
    %145 = vmatpush1.bf16.msra.mxu0 0
    %146 = vmatprep.subr.bf16.mxu0 0
    %147 = vmatpush1.bf16.msra.mxu0 0
    %148 = vmatprep.subr.bf16.mxu0 0
    %149 = vmatpush1.bf16.msra.mxu0 0
    %150 = vmatprep.subr.bf16.mxu0 0
    %151 = vmatpush1.bf16.msra.mxu0 %v133
    %152 = vmatprep.subr.bf16.mxu0 0
    %153 = vmatpush1.bf16.msra.mxu0 %v132
    %154 = vmatprep.subr.bf16.mxu0 0
    %155 = vmatpush1.bf16.msra.mxu0 %v131
    %156 = vmatprep.subr.bf16.mxu0 0
    %157 = vmatpush1.bf16.msra.mxu0 %v130
    %158 = vmatprep.subr.bf16.mxu0 0
    %159 = vmatpush2.bf16.msra.mxu0 0
    %160 = vmatprep.subr.bf16.mxu0 0
    %161 = vmatpush2.bf16.msra.mxu0 0
    %162 = vmatprep.subr.bf16.mxu0 0
    %163 = vmatpush2.bf16.msra.mxu0 0
    %164 = vmatprep.subr.bf16.mxu0 0
    %165 = vmatpush2.bf16.msra.mxu0 0
    %166 = vmatprep.subr.bf16.mxu0 0
    %167 = vmatpush2.bf16.msra.mxu0 0
    %168 = vmatprep.subr.bf16.mxu0 0
    %169 = vmatpush2.bf16.msra.mxu0 0
    %170 = vmatprep.subr.bf16.mxu0 0
    %171 = vmatpush2.bf16.msra.mxu0 0
    %172 = vmatprep.subr.bf16.mxu0 0
    %173 = vmatpush2.bf16.msra.mxu0 0
    %174 = vmatprep.mubr.bf16.mxu0 0
    %175 = vmatmul.mubr.bf16.gmra.mxu0 %v140
    %v176 = vpop.f32.mrf.mxu0
    %v177 = vadd.f32 %v112, %v176
    %v178 = vpop.f32.mrf.mxu0
    %v179 = vpop.f32.mrf.mxu0
    %v180 = vpop.f32.mrf.mxu0
    %181 = vdwg.mxu0
    %v182 = vmax.f32 %v177, 0.0
    %v183 = vpack.c.bf16 %v182, %v182
    %v184 = vld [vmem:[%s5] sm:$0xf]
    %v185 = vld [vmem:[%s5 + $0x4] sm:$0xf]
    %v186 = vld [vmem:[%s5 + $0x8] sm:$0xf]
    %v187 = vld [vmem:[%s5 + $0xc] sm:$0xf]
    %v188 = vld [vmem:[%s6] sm:$0x1]
    %v190 = vlaneseq
    %v191 = vshrl.u32 %v190, 7
    %v192 = vsub.s32 0, %v191
    %v193 = vrot.slane %v188, %v192
    %v199 = vunpack.c.l.b16 %v184
    %v200 = vunpack.c.l.b16 %v185
    %v201 = vunpack.c.l.b16 %v186
    %v202 = vunpack.c.l.b16 %v187
    %v203 = vpack.c.b16 %v200, %v199
    %v204 = vpack.c.b16 %v202, %v201
    %v208 = vsel %vm53, %v183, 0
    %210 = vmatprep.subr.bf16.mxu0 0
    %211 = vmatpush1.bf16.msra.mxu0 0
    %212 = vmatprep.subr.bf16.mxu0 0
    %213 = vmatpush1.bf16.msra.mxu0 0
    %214 = vmatprep.subr.bf16.mxu0 0
    %215 = vmatpush1.bf16.msra.mxu0 0
    %216 = vmatprep.subr.bf16.mxu0 0
    %217 = vmatpush1.bf16.msra.mxu0 0
    %218 = vmatprep.subr.bf16.mxu0 0
    %219 = vmatpush1.bf16.msra.mxu0 0
    %220 = vmatprep.subr.bf16.mxu0 0
    %221 = vmatpush1.bf16.msra.mxu0 0
    %222 = vmatprep.subr.bf16.mxu0 0
    %223 = vmatpush1.bf16.msra.mxu0 %v204
    %224 = vmatprep.subr.bf16.mxu0 0
    %225 = vmatpush1.bf16.msra.mxu0 %v203
    %226 = vmatprep.subr.bf16.mxu0 0
    %227 = vmatpush2.bf16.msra.mxu0 0
    %228 = vmatprep.subr.bf16.mxu0 0
    %229 = vmatpush2.bf16.msra.mxu0 0
    %230 = vmatprep.subr.bf16.mxu0 0
    %231 = vmatpush2.bf16.msra.mxu0 0
    %232 = vmatprep.subr.bf16.mxu0 0
    %233 = vmatpush2.bf16.msra.mxu0 0
    %234 = vmatprep.subr.bf16.mxu0 0
    %235 = vmatpush2.bf16.msra.mxu0 0
    %236 = vmatprep.subr.bf16.mxu0 0
    %237 = vmatpush2.bf16.msra.mxu0 0
    %238 = vmatprep.subr.bf16.mxu0 0
    %239 = vmatpush2.bf16.msra.mxu0 0
    %240 = vmatprep.subr.bf16.mxu0 0
    %241 = vmatpush2.bf16.msra.mxu0 0
    %242 = vmatprep.mubr.bf16.mxu0 0
    %243 = vmatmul.mubr.bf16.gmra.mxu0 %v208
    %v244 = vpop.f32.mrf.mxu0
    %v245 = vadd.f32 %v193, %v244
    %v246 = vpop.f32.mrf.mxu0
    %v247 = vpop.f32.mrf.mxu0
    %v248 = vpop.f32.mrf.mxu0
    %249 = vdwg.mxu0
    %250 = vst [vmem:[#allocation2] sm:$0xff] %v245
    // Predicated region
    $region30: #{tpu_custom_call.1} parent=1 // pred_check
      _
    $region31: #{tpu_custom_call.1} parent=1 // pred_check_branch
      %252 = sbr.rel (0) target = $region33
    $region32: #{tpu_custom_call.1} parent=1 // pred_region
      %s254 = ssub.s32 128, 128
      %255 = vsyncadd [#allocation3], %s254
      %s257 = sshll.u32 [#allocation2], 4
      %s258 = int_to_ptr.vmem [resolvable:$true] %s257
      %260 = dma.vmem_to_hbm [thread:$0]  %s258, 128, %s7, [#allocation3]
    $region33: #{tpu_custom_call.1} parent=1 // pred_fallthru
      _
    // Predicated region
    $region34: #{tpu_custom_call.1} parent=1 // pred_check
      _
    $region35: #{tpu_custom_call.1} parent=1 // pred_check_branch
      %262 = sbr.rel (0) target = $region37
    $region36: #{tpu_custom_call.1} parent=1 // pred_region
      %263 = dma.done [#allocation3], 128
    $region37: #{tpu_custom_call.1} parent=1 // pred_fallthru
      _
    %264 = vsyncpa [#allocation3], 1

</llo_original>
